<compile_context>
chip_gen: v6e
topology: v6e:2x2x1
jax: 0.10.0
libtpu: 0.0.40
codegen_flags: <defaults>
</compile_context>

<pallas_src>
import functools

import jax
import jax.numpy as jnp
from jax.experimental import pallas as pl
from jax.experimental.pallas import tpu as pltpu


def _round_up(x, m):
    return ((x + m - 1) // m) * m


def mlp_kernel(x_ref, w1_ref, b1_ref, w2_ref, b2_ref, w3_ref, b3_ref, o_ref):
    # Layer 1: bf16 x bf16 -> f32 MXU matmul, f32 bias + ReLU.
    x = x_ref[...].astype(jnp.bfloat16)
    h1 = jnp.dot(x, w1_ref[...], preferred_element_type=jnp.float32)
    h1 = jnp.maximum(h1 + b1_ref[...], 0.0)
    # Layer 2: bf16 MXU feed (zero-padded hidden widths keep semantics exact).
    h2 = jnp.dot(h1.astype(jnp.bfloat16), w2_ref[...],
                 preferred_element_type=jnp.float32)
    h2 = jnp.maximum(h2 + b2_ref[...], 0.0)
    # Layer 3: logits (no activation); unpadded (TB, C) store.
    out = jnp.dot(h2.astype(jnp.bfloat16), w3_ref[...],
                  preferred_element_type=jnp.float32)
    o_ref[...] = (out + b3_ref[...]).astype(o_ref.dtype)


def pack_params(params):
    """One-time pad/cast of parameters (call once, outside the forward path).

    Weights stored (in, out), biases (1, out). Hidden widths zero-padded to 128
    lanes (exact: relu(0 + 0) = 0 and padded weight rows are zero); output width C
    is left unpadded. Weights bf16 (MXU), biases f32.
    """
    w1, b1, w2, b2, w3, b3 = (params[k] for k in ("w1", "b1", "w2", "b2", "w3", "b3"))
    F, H1 = w1.shape
    H2, C = w2.shape[1], w3.shape[1]
    H1p, H2p = _round_up(H1, 128), _round_up(H2, 128)

    w1p = jnp.zeros((F, H1p), jnp.bfloat16).at[:, :H1].set(w1.astype(jnp.bfloat16))
    b1p = jnp.zeros((1, H1p), jnp.float32).at[:, :H1].set(b1.reshape(1, H1))
    w2p = jnp.zeros((H1p, H2p), jnp.bfloat16).at[:H1, :H2].set(w2.astype(jnp.bfloat16))
    b2p = jnp.zeros((1, H2p), jnp.float32).at[:, :H2].set(b2.reshape(1, H2))
    w3p = jnp.zeros((H2p, C), jnp.bfloat16).at[:H2, :].set(w3.astype(jnp.bfloat16))
    b3p = b3.reshape(1, C).astype(jnp.float32)
    return (w1p, b1p, w2p, b2p, w3p, b3p)


def _const_spec(shape):
    zeros = (0,) * len(shape)
    return pl.BlockSpec(shape, lambda i: zeros)


@functools.partial(jax.jit, static_argnames=("block_b",))
def neural_net_forward(x, packed, *, block_b=2048):
    """x: (B, F) float32; packed: output of pack_params. Returns (B, C) float32."""
    w1p, b1p, w2p, b2p, w3p, b3p = packed
    B, F = x.shape
    H1p, H2p, C = w1p.shape[1], w2p.shape[1], w3p.shape[1]

    # Batch tile: multiple of 8 (sublane); ensure >= 2 grid steps when B allows so the
    # parallel grid axis shards across both v7x TensorCores.
    TB = min(block_b, max(8, _round_up(pl.cdiv(B, 2), 8)))
    Bp = _round_up(B, TB)
    xp = x if Bp == B else jnp.pad(x, ((0, Bp - B), (0, 0)))

    grid = (Bp // TB,)

    # VMEM budget: double-buffered x/out tiles + resident weights + f32/bf16
    # intermediates; 2x headroom, capped for v7x's 64 MiB physical VMEM.
    vmem_bytes = (
        2 * TB * F * 4                                   # x tiles (f32), double-buffered
        + 2 * TB * C * 4                                 # out tiles (f32), double-buffered
        + (w1p.size + w2p.size + w3p.size) * 2           # bf16 weights, VMEM-resident
        + (b1p.size + b2p.size + b3p.size) * 4           # f32 biases
        + TB * (H1p + H2p) * (4 + 2)                     # h1/h2 f32 + bf16 casts
        + TB * (F * 2 + C * 4)                           # x bf16 cast + logits
    )
    vmem_limit = int(min(max(2 * vmem_bytes, 4 * 1024 * 1024), 48 * 1024 * 1024))

    cost = pl.CostEstimate(
        flops=2 * Bp * (F * 64 + 64 * 32 + 32 * C),
        transcendentals=0,
        bytes_accessed=int(
            xp.size * 4
            + (w1p.size + w2p.size + w3p.size) * 2
            + (b1p.size + b2p.size + b3p.size) * 4
            + Bp * C * 4
        ),
    )

    out = pl.pallas_call(
        mlp_kernel,
        out_shape=jax.ShapeDtypeStruct((Bp, C), jnp.float32),
        grid=grid,
        in_specs=[
            pl.BlockSpec((TB, F), lambda i: (i, 0)),   # x: tiled over batch
            _const_spec(w1p.shape),                    # weights/biases: VMEM-resident
            _const_spec(b1p.shape),
            _const_spec(w2p.shape),
            _const_spec(b2p.shape),
            _const_spec(w3p.shape),
            _const_spec(b3p.shape),
        ],
        out_specs=pl.BlockSpec((TB, C), lambda i: (i, 0)),
        compiler_params=pltpu.CompilerParams(
            dimension_semantics=("parallel",),
            vmem_limit_bytes=vmem_limit,
        ),
        cost_estimate=cost,
    )(xp, w1p, b1p, w2p, b2p, w3p, b3p)

    return out if Bp == B else out[:B]


def init_params(key, num_features, num_classes):
    """Deterministic init mimicking torch.nn.Linear default (uniform +-1/sqrt(fan_in))."""
    dims = [(num_features, 64), (64, 32), (32, num_classes)]
    params = {}
    for i, (fin, fout) in enumerate(dims, start=1):
        key, kw, kb = jax.random.split(key, 3)
        bound = 1.0 / (fin ** 0.5)
        # store weight as (in, out) == transpose of torch's (out, in)
        params[f"w{i}"] = jax.random.uniform(
            kw, (fin, fout), jnp.float32, minval=-bound, maxval=bound
        )
        params[f"b{i}"] = jax.random.uniform(
            kb, (1, fout), jnp.float32, minval=-bound, maxval=bound
        )
    return params


def reference_forward(x, params):
    """Pure-JAX reference mirroring the kernel's bf16 MXU feeds / f32 accumulation."""
    bf = lambda a: a.astype(jnp.bfloat16)
    h1 = jnp.dot(bf(x), bf(params["w1"]), preferred_element_type=jnp.float32)
    h1 = jnp.maximum(h1 + params["b1"], 0.0)
    h2 = jnp.dot(bf(h1), bf(params["w2"]), preferred_element_type=jnp.float32)
    h2 = jnp.maximum(h2 + params["b2"], 0.0)
    out = jnp.dot(bf(h2), bf(params["w3"]), preferred_element_type=jnp.float32)
    return out + params["b3"]


if __name__ == "__main__":
    key = jax.random.PRNGKey(0)
    B, F, C = 8, 32, 8  # batch, num_features, num_classes

    key, kx = jax.random.split(key)
    x = jax.random.normal(kx, (B, F), jnp.float32)
    params = init_params(key, F, C)
    packed = pack_params(params)  # one-time pad/cast, outside the forward path

    out = neural_net_forward(x, packed)
    out = jax.block_until_ready(out)

    ref = reference_forward(x, params)
    assert out.shape == (B, C), f"bad shape {out.shape}"
    assert jnp.allclose(out, ref, atol=2e-3, rtol=2e-3), "mismatch vs JAX reference"

    print("KERNEL_OK")
</pallas_src>

<mosaic_0001>
module attributes {stable_mosaic.version = 11 : i64} {
  func.func @mlp_kernel(%arg0: i32, %arg1: memref<8x32xf32, #tpu.memory_space<vmem>>, %arg2: memref<32x128xbf16, #tpu.memory_space<vmem>>, %arg3: memref<1x128xf32, #tpu.memory_space<vmem>>, %arg4: memref<128x128xbf16, #tpu.memory_space<vmem>>, %arg5: memref<1x128xf32, #tpu.memory_space<vmem>>, %arg6: memref<128x8xbf16, #tpu.memory_space<vmem>>, %arg7: memref<1x8xf32, #tpu.memory_space<vmem>>, %arg8: memref<8x8xf32, #tpu.memory_space<vmem>>) attributes {dimension_semantics = [#tpu.dimension_semantics<parallel>], iteration_bounds = array<i64: 1>, scalar_prefetch = 0 : i64, scratch_operands = 0 : i64, tpu.core_type = #tpu.core_type<tc>, window_params = [{transform_indices = @transform_0, window_bounds = array<i64: 8, 32>}, {pipeline_mode = #tpu.pipeline_mode<synchronous>, transform_indices = @transform_1, window_bounds = array<i64: 32, 128>}, {pipeline_mode = #tpu.pipeline_mode<synchronous>, transform_indices = @transform_2, window_bounds = array<i64: 1, 128>}, {pipeline_mode = #tpu.pipeline_mode<synchronous>, transform_indices = @transform_3, window_bounds = array<i64: 128, 128>}, {pipeline_mode = #tpu.pipeline_mode<synchronous>, transform_indices = @transform_4, window_bounds = array<i64: 1, 128>}, {pipeline_mode = #tpu.pipeline_mode<synchronous>, transform_indices = @transform_5, window_bounds = array<i64: 128, 8>}, {pipeline_mode = #tpu.pipeline_mode<synchronous>, transform_indices = @transform_6, window_bounds = array<i64: 1, 8>}, {transform_indices = @transform_7, window_bounds = array<i64: 8, 8>}]} {
    %c0 = arith.constant 0 : index
    %c0_0 = arith.constant 0 : index
    %0 = vector.load %arg1[%c0, %c0_0] : memref<8x32xf32, #tpu.memory_space<vmem>>, vector<8x32xf32>
    %1 = arith.truncf %0 : vector<8x32xf32> to vector<8x32xbf16>
    %c0_1 = arith.constant 0 : index
    %c0_2 = arith.constant 0 : index
    %2 = vector.load %arg2[%c0_1, %c0_2] : memref<32x128xbf16, #tpu.memory_space<vmem>>, vector<32x128xbf16>
    %cst = arith.constant dense<0.000000e+00> : vector<8x128xf32>
    %3 = tpu.matmul %1, %2, %cst {dimension_numbers = #tpu.dot_dimension_numbers<[1], [0], [0], [1], [0, 0, 1, 1], [], []>} : vector<8x32xbf16>, vector<32x128xbf16>, vector<8x128xf32> -> vector<8x128xf32>
    %c0_3 = arith.constant 0 : index
    %c0_4 = arith.constant 0 : index
    %4 = vector.load %arg3[%c0_3, %c0_4] : memref<1x128xf32, #tpu.memory_space<vmem>>, vector<1x128xf32>
    %5 = vector.broadcast %4 : vector<1x128xf32> to vector<8x128xf32>
    %6 = arith.addf %3, %5 : vector<8x128xf32>
    %cst_5 = arith.constant 0.000000e+00 : f32
    %7 = vector.broadcast %cst_5 : f32 to vector<8x128xf32>
    %8 = arith.maximumf %6, %7 : vector<8x128xf32>
    %9 = arith.truncf %8 : vector<8x128xf32> to vector<8x128xbf16>
    %c0_6 = arith.constant 0 : index
    %c0_7 = arith.constant 0 : index
    %10 = vector.load %arg4[%c0_6, %c0_7] : memref<128x128xbf16, #tpu.memory_space<vmem>>, vector<128x128xbf16>
    %cst_8 = arith.constant dense<0.000000e+00> : vector<8x128xf32>
    %11 = tpu.matmul %9, %10, %cst_8 {dimension_numbers = #tpu.dot_dimension_numbers<[1], [0], [0], [1], [0, 0, 1, 1], [], []>} : vector<8x128xbf16>, vector<128x128xbf16>, vector<8x128xf32> -> vector<8x128xf32>
    %c0_9 = arith.constant 0 : index
    %c0_10 = arith.constant 0 : index
    %12 = vector.load %arg5[%c0_9, %c0_10] : memref<1x128xf32, #tpu.memory_space<vmem>>, vector<1x128xf32>
    %13 = vector.broadcast %12 : vector<1x128xf32> to vector<8x128xf32>
    %14 = arith.addf %11, %13 : vector<8x128xf32>
    %cst_11 = arith.constant 0.000000e+00 : f32
    %15 = vector.broadcast %cst_11 : f32 to vector<8x128xf32>
    %16 = arith.maximumf %14, %15 : vector<8x128xf32>
    %17 = arith.truncf %16 : vector<8x128xf32> to vector<8x128xbf16>
    %c0_12 = arith.constant 0 : index
    %c0_13 = arith.constant 0 : index
    %18 = vector.load %arg6[%c0_12, %c0_13] : memref<128x8xbf16, #tpu.memory_space<vmem>>, vector<128x8xbf16>
    %cst_14 = arith.constant dense<0.000000e+00> : vector<8x8xf32>
    %19 = tpu.matmul %17, %18, %cst_14 {dimension_numbers = #tpu.dot_dimension_numbers<[1], [0], [0], [1], [0, 0, 1, 1], [], []>} : vector<8x128xbf16>, vector<128x8xbf16>, vector<8x8xf32> -> vector<8x8xf32>
    %c0_15 = arith.constant 0 : index
    %c0_16 = arith.constant 0 : index
    %20 = vector.load %arg7[%c0_15, %c0_16] : memref<1x8xf32, #tpu.memory_space<vmem>>, vector<1x8xf32>
    %21 = vector.broadcast %20 : vector<1x8xf32> to vector<8x8xf32>
    %22 = arith.addf %19, %21 : vector<8x8xf32>
    %c0_17 = arith.constant 0 : index
    %c0_18 = arith.constant 0 : index
    %23 = vector.load %arg8[%c0_17, %c0_18] : memref<8x8xf32, #tpu.memory_space<vmem>>, vector<8x8xf32>
    tpu.vector_store %arg8[%c0_17, %c0_18], %22 {strides = array<i32>} : memref<8x8xf32, #tpu.memory_space<vmem>>, vector<8x8xf32>,
    return
  }
  func.func @transform_0(%arg0: i32) -> (i32, i32) {
    %c0_i32 = arith.constant 0 : i32
    %c0_i32_0 = arith.constant 0 : i32
    return %arg0, %c0_i32 : i32, i32
  }
  func.func @transform_1(%arg0: i32) -> (i32, i32) {
    %c0_i32 = arith.constant 0 : i32
    %c0_i32_0 = arith.constant 0 : i32
    %c0_i32_1 = arith.constant 0 : i32
    return %c0_i32, %c0_i32_0 : i32, i32
  }
  func.func @transform_2(%arg0: i32) -> (i32, i32) {
    %c0_i32 = arith.constant 0 : i32
    %c0_i32_0 = arith.constant 0 : i32
    %c0_i32_1 = arith.constant 0 : i32
    return %c0_i32, %c0_i32_0 : i32, i32
  }
  func.func @transform_3(%arg0: i32) -> (i32, i32) {
    %c0_i32 = arith.constant 0 : i32
    %c0_i32_0 = arith.constant 0 : i32
    %c0_i32_1 = arith.constant 0 : i32
    return %c0_i32, %c0_i32_0 : i32, i32
  }
  func.func @transform_4(%arg0: i32) -> (i32, i32) {
    %c0_i32 = arith.constant 0 : i32
    %c0_i32_0 = arith.constant 0 : i32
    %c0_i32_1 = arith.constant 0 : i32
    return %c0_i32, %c0_i32_0 : i32, i32
  }
  func.func @transform_5(%arg0: i32) -> (i32, i32) {
    %c0_i32 = arith.constant 0 : i32
    %c0_i32_0 = arith.constant 0 : i32
    %c0_i32_1 = arith.constant 0 : i32
    return %c0_i32, %c0_i32_0 : i32, i32
  }
  func.func @transform_6(%arg0: i32) -> (i32, i32) {
    %c0_i32 = arith.constant 0 : i32
    %c0_i32_0 = arith.constant 0 : i32
    %c0_i32_1 = arith.constant 0 : i32
    return %c0_i32, %c0_i32_0 : i32, i32
  }
  func.func @transform_7(%arg0: i32) -> (i32, i32) {
    %c0_i32 = arith.constant 0 : i32
    %c0_i32_0 = arith.constant 0 : i32
    return %arg0, %c0_i32 : i32, i32
  }
}

</mosaic_0001>

<llo_original>
// kernel: neural_net_forward.1
$region0: #{neural_net_forward.1}
  #allocation0 [shape = 'u32[]', space=smem, size = 0x4, offset = 0x4, fixed_abs, tag = 'smem constant byte address 0x4 - core index']
  #allocation1 [shape = 'u32[144,128]{1,0:T(1,128)}', space=vmem, size = 0x12000, scoped, tag = 'internal scratch']
  %s0 = inlined_call_operand.vmem [shape: f32[8,32], index: 0, kind: input, shape index: {}]
  %s1 = inlined_call_operand.hbm [shape: bf16[32,128], index: 1, kind: input, shape index: {}]
  %s2 = inlined_call_operand.vmem [shape: f32[1,128], index: 2, kind: input, shape index: {}]
  %s3 = inlined_call_operand.vmem [shape: bf16[128,128], index: 3, kind: input, shape index: {}]
  %s4 = inlined_call_operand.hbm [shape: f32[1,128], index: 4, kind: input, shape index: {}]
  %s5 = inlined_call_operand.vmem [shape: bf16[128,8], index: 5, kind: input, shape index: {}]
  %s6 = inlined_call_operand.vmem [shape: f32[1,8], index: 6, kind: input, shape index: {}]
  %s7 = inlined_call_operand.hbm [shape: f32[8,8], index: 7, kind: output, shape index: {}]
  %s8 = sld [smem:[#allocation0]]
  $region46: #{neural_net_forward.1} parent=0
    _
  %s10 = ssub.s32 1, %s8
  %s11 = scalar_select 0, %s10, %s8
  $region1: #{neural_net_forward.1} parent=0
    #allocation2 [shape = 'u8[8192]{0}', space=vmem, size = 0x2000, scoped, tag = 'input window, operand 1, single buffered']
    #allocation3 [shape = 's32[1]{0}', space=sflag, size = 0x4, scoped, tag = 'scoped memory for neural_net_forward.1']
    #allocation4 [shape = 's32[1]{0}', space=sflag, size = 0x4, scoped, tag = 'scoped memory for neural_net_forward.1']
    #allocation5 [shape = 'u8[512]{0}', space=vmem, size = 0x400, scoped, tag = 'input window, operand 4, single buffered']
    #allocation6 [shape = 's32[1]{0}', space=sflag, size = 0x4, scoped, tag = 'scoped memory for neural_net_forward.1']
    #allocation7 [shape = 'u8[4096]{0}', space=vmem, size = 0x1000, scoped, tag = 'output window, operand 0, single buffered']
    %12 = vsyncpa [#allocation3], 0
    %13 = vsyncpa [#allocation6], 0
    %14 = vsyncpa [#allocation4], 0
    // Predicated region
    $region2: #{neural_net_forward.1} parent=1 // pred_check
      _
    $region3: #{neural_net_forward.1} parent=1 // pred_check_branch
      %16 = sbr.rel (0) target = $region5
    $region4: #{neural_net_forward.1} parent=1 // pred_region
      _
    $region5: #{neural_net_forward.1} parent=1 // pred_fallthru
      _
    // Predicated region
    $region6: #{neural_net_forward.1} parent=1 // pred_check
      _
    $region7: #{neural_net_forward.1} parent=1 // pred_check_branch
      %18 = sbr.rel (0) target = $region9
    $region8: #{neural_net_forward.1} parent=1 // pred_region
      %s20 = ssub.s32 256, 256
      %21 = vsyncadd [#allocation3], %s20
      %s22 = sshll.u32 [#allocation2], 4
      %s23 = int_to_ptr.vmem [resolvable:$true] %s22
      %28 = dma.hbm_to_vmem [thread:$0]  %s1, 256, %s23, [#allocation3], 64, 64, 4
    $region9: #{neural_net_forward.1} parent=1 // pred_fallthru
      _
    // Predicated region
    $region10: #{neural_net_forward.1} parent=1 // pred_check
      _
    $region11: #{neural_net_forward.1} parent=1 // pred_check_branch
      %30 = sbr.rel (0) target = $region13
    $region12: #{neural_net_forward.1} parent=1 // pred_region
      _
    $region13: #{neural_net_forward.1} parent=1 // pred_fallthru
      _
    // Predicated region
    $region14: #{neural_net_forward.1} parent=1 // pred_check
      _
    $region15: #{neural_net_forward.1} parent=1 // pred_check_branch
      %32 = sbr.rel (0) target = $region17
    $region16: #{neural_net_forward.1} parent=1 // pred_region
      _
    $region17: #{neural_net_forward.1} parent=1 // pred_fallthru
      _
    // Predicated region
    $region18: #{neural_net_forward.1} parent=1 // pred_check
      _
    $region19: #{neural_net_forward.1} parent=1 // pred_check_branch
      %34 = sbr.rel (0) target = $region21
    $region20: #{neural_net_forward.1} parent=1 // pred_region
      %s36 = ssub.s32 16, 16
      %37 = vsyncadd [#allocation6], %s36
      %s39 = sshll.u32 [#allocation5], 4
      %s40 = int_to_ptr.vmem [resolvable:$true] %s39
      %42 = dma.hbm_to_vmem [thread:$0]  %s4, 16, %s40, [#allocation6]
    $region21: #{neural_net_forward.1} parent=1 // pred_fallthru
      _
    // Predicated region
    $region22: #{neural_net_forward.1} parent=1 // pred_check
      _
    $region23: #{neural_net_forward.1} parent=1 // pred_check_branch
      %44 = sbr.rel (0) target = $region25
    $region24: #{neural_net_forward.1} parent=1 // pred_region
      _
    $region25: #{neural_net_forward.1} parent=1 // pred_fallthru
      _
    // Predicated region
    $region26: #{neural_net_forward.1} parent=1 // pred_check
      _
    $region27: #{neural_net_forward.1} parent=1 // pred_check_branch
      %46 = sbr.rel (0) target = $region29
    $region28: #{neural_net_forward.1} parent=1 // pred_region
      _
    $region29: #{neural_net_forward.1} parent=1 // pred_fallthru
      _
    // Predicated region
    $region30: #{neural_net_forward.1} parent=1 // pred_check
      _
    $region31: #{neural_net_forward.1} parent=1 // pred_check_branch
      %48 = sbr.rel (0) target = $region33
    $region32: #{neural_net_forward.1} parent=1 // pred_region
      %49 = dma.done [#allocation3], 256
    $region33: #{neural_net_forward.1} parent=1 // pred_fallthru
      _
    // Predicated region
    $region34: #{neural_net_forward.1} parent=1 // pred_check
      _
    $region35: #{neural_net_forward.1} parent=1 // pred_check_branch
      %51 = sbr.rel (0) target = $region37
    $region36: #{neural_net_forward.1} parent=1 // pred_region
      %52 = dma.done [#allocation6], 16
    $region37: #{neural_net_forward.1} parent=1 // pred_fallthru
      _
    %v54 = vld [vmem:[%s0] sm:$0xff]
    %v55 = vpack.c.bf16 %v54, %v54
    %v56 = vld [vmem:[#allocation2] sm:$0xf]
    %v57 = vld [vmem:[#allocation2 + $0x4] sm:$0xf]
    %v58 = vld [vmem:[#allocation2 + $0x8] sm:$0xf]
    %v59 = vld [vmem:[#allocation2 + $0xc] sm:$0xf]
    %v60 = vld [vmem:[%s2] sm:$0x1]
    %v62 = vlaneseq
    %v63 = vshrl.u32 %v62, 7
    %v64 = vsub.s32 0, %v63
    %v65 = vrot.slane %v60, %v64
    %v71 = vunpack.c.l.b16 %v56
    %v72 = vunpack.c.l.b16 %v57
    %v73 = vunpack.c.l.b16 %v58
    %v74 = vunpack.c.l.b16 %v59
    %v75 = vpack.c.b16 %v72, %v71
    %v76 = vpack.c.b16 %v74, %v73
    %vm79 = vcmask 261120
    %v81 = vsel %vm79, %v55, 0
    %83 = vmatprep.subr.bf16.mxu0 0
    %84 = vmatpush1.bf16.msra.mxu0 0
    %85 = vmatprep.subr.bf16.mxu0 0
    %86 = vmatpush1.bf16.msra.mxu0 0
    %87 = vmatprep.subr.bf16.mxu0 0
    %88 = vmatpush1.bf16.msra.mxu0 0
    %89 = vmatprep.subr.bf16.mxu0 0
    %90 = vmatpush1.bf16.msra.mxu0 0
    %91 = vmatprep.subr.bf16.mxu0 0
    %92 = vmatpush1.bf16.msra.mxu0 0
    %93 = vmatprep.subr.bf16.mxu0 0
    %94 = vmatpush1.bf16.msra.mxu0 0
    %95 = vmatprep.subr.bf16.mxu0 0
    %96 = vmatpush1.bf16.msra.mxu0 %v76
    %97 = vmatprep.subr.bf16.mxu0 0
    %98 = vmatpush1.bf16.msra.mxu0 %v75
    %99 = vmatprep.subr.bf16.mxu0 0
    %100 = vmatpush2.bf16.msra.mxu0 0
    %101 = vmatprep.subr.bf16.mxu0 0
    %102 = vmatpush2.bf16.msra.mxu0 0
    %103 = vmatprep.subr.bf16.mxu0 0
    %104 = vmatpush2.bf16.msra.mxu0 0
    %105 = vmatprep.subr.bf16.mxu0 0
    %106 = vmatpush2.bf16.msra.mxu0 0
    %107 = vmatprep.subr.bf16.mxu0 0
    %108 = vmatpush2.bf16.msra.mxu0 0
    %109 = vmatprep.subr.bf16.mxu0 0
    %110 = vmatpush2.bf16.msra.mxu0 0
    %111 = vmatprep.subr.bf16.mxu0 0
    %112 = vmatpush2.bf16.msra.mxu0 0
    %113 = vmatprep.subr.bf16.mxu0 0
    %114 = vmatpush2.bf16.msra.mxu0 0
    %115 = vmatprep.mubr.bf16.mxu0 0
    %116 = vmatmul.mubr.bf16.gmra.mxu0 %v81
    %v117 = vpop.f32.mrf.mxu0
    %v118 = vadd.f32 %v65, %v117
    %v119 = vpop.f32.mrf.mxu0
    %v120 = vpop.f32.mrf.mxu0
    %v121 = vpop.f32.mrf.mxu0
    %122 = vdwg.mxu0
    %v123 = vmax.f32 %v118, 0.0
    %v124 = vpack.c.bf16 %v123, %v123
    %v125 = vld [vmem:[%s3] sm:$0xf]
    %v126 = vld [vmem:[%s3 + $0x4] sm:$0xf]
    %v127 = vld [vmem:[%s3 + $0x8] sm:$0xf]
    %v128 = vld [vmem:[%s3 + $0xc] sm:$0xf]
    %v129 = vld [vmem:[%s3 + $0x10] sm:$0xf]
    %v130 = vld [vmem:[%s3 + $0x14] sm:$0xf]
    %v131 = vld [vmem:[%s3 + $0x18] sm:$0xf]
    %v132 = vld [vmem:[%s3 + $0x1c] sm:$0xf]
    %v133 = vld [vmem:[%s3 + $0x20] sm:$0xf]
    %v134 = vld [vmem:[%s3 + $0x24] sm:$0xf]
    %v135 = vld [vmem:[%s3 + $0x28] sm:$0xf]
    %v136 = vld [vmem:[%s3 + $0x2c] sm:$0xf]
    %v137 = vld [vmem:[%s3 + $0x30] sm:$0xf]
    %v138 = vld [vmem:[%s3 + $0x34] sm:$0xf]
    %v139 = vld [vmem:[%s3 + $0x38] sm:$0xf]
    %v140 = vld [vmem:[%s3 + $0x3c] sm:$0xf]
    %v141 = vld [vmem:[#allocation5] sm:$0x1]
    %v143 = vlaneseq
    %v144 = vshrl.u32 %v143, 7
    %v145 = vsub.s32 0, %v144
    %v146 = vrot.slane %v141, %v145
    %v164 = vunpack.c.l.b16 %v125
    %v165 = vunpack.c.l.b16 %v126
    %v166 = vunpack.c.l.b16 %v127
    %v167 = vunpack.c.l.b16 %v128
    %v168 = vunpack.c.l.b16 %v129
    %v169 = vunpack.c.l.b16 %v130
    %v170 = vunpack.c.l.b16 %v131
    %v171 = vunpack.c.l.b16 %v132
    %v172 = vunpack.c.l.b16 %v133
    %v173 = vunpack.c.l.b16 %v134
    %v174 = vunpack.c.l.b16 %v135
    %v175 = vunpack.c.l.b16 %v136
    %v176 = vunpack.c.l.b16 %v137
    %v177 = vunpack.c.l.b16 %v138
    %v178 = vunpack.c.l.b16 %v139
    %v179 = vunpack.c.l.b16 %v140
    %v180 = vpack.c.b16 %v165, %v164
    %v181 = vpack.c.b16 %v167, %v166
    %v182 = vpack.c.b16 %v169, %v168
    %v183 = vpack.c.b16 %v171, %v170
    %v184 = vpack.c.b16 %v173, %v172
    %v185 = vpack.c.b16 %v175, %v174
    %v186 = vpack.c.b16 %v177, %v176
    %v187 = vpack.c.b16 %v179, %v178
    %196 = vmatprep.subr.bf16.mxu0 0
    %197 = vmatpush1.bf16.msra.mxu0 %v187
    %198 = vmatprep.subr.bf16.mxu0 0
    %199 = vmatpush1.bf16.msra.mxu0 %v186
    %200 = vmatprep.subr.bf16.mxu0 0
    %201 = vmatpush1.bf16.msra.mxu0 %v185
    %202 = vmatprep.subr.bf16.mxu0 0
    %203 = vmatpush1.bf16.msra.mxu0 %v184
    %204 = vmatprep.subr.bf16.mxu0 0
    %205 = vmatpush1.bf16.msra.mxu0 %v183
    %206 = vmatprep.subr.bf16.mxu0 0
    %207 = vmatpush1.bf16.msra.mxu0 %v182
    %208 = vmatprep.subr.bf16.mxu0 0
    %209 = vmatpush1.bf16.msra.mxu0 %v181
    %210 = vmatprep.subr.bf16.mxu0 0
    %211 = vmatpush1.bf16.msra.mxu0 %v180
    %212 = vmatprep.subr.bf16.mxu0 0
    %213 = vmatpush2.bf16.msra.mxu0 0
    %214 = vmatprep.subr.bf16.mxu0 0
    %215 = vmatpush2.bf16.msra.mxu0 0
    %216 = vmatprep.subr.bf16.mxu0 0
    %217 = vmatpush2.bf16.msra.mxu0 0
    %218 = vmatprep.subr.bf16.mxu0 0
    %219 = vmatpush2.bf16.msra.mxu0 0
    %220 = vmatprep.subr.bf16.mxu0 0
    %221 = vmatpush2.bf16.msra.mxu0 0
    %222 = vmatprep.subr.bf16.mxu0 0
    %223 = vmatpush2.bf16.msra.mxu0 0
    %224 = vmatprep.subr.bf16.mxu0 0
    %225 = vmatpush2.bf16.msra.mxu0 0
    %226 = vmatprep.subr.bf16.mxu0 0
    %227 = vmatpush2.bf16.msra.mxu0 0
    %228 = vmatprep.mubr.bf16.mxu0 0
    %229 = vmatmul.mubr.bf16.gmra.mxu0 %v124
    %v230 = vpop.f32.mrf.mxu0
    %v231 = vadd.f32 %v146, %v230
    %v232 = vpop.f32.mrf.mxu0
    %v233 = vpop.f32.mrf.mxu0
    %v234 = vpop.f32.mrf.mxu0
    %235 = vdwg.mxu0
    %v236 = vmax.f32 %v231, 0.0
    %v237 = vpack.c.bf16 %v236, %v236
    %v238 = vld [vmem:[%s5] sm:$0xf]
    %v239 = vld [vmem:[%s5 + $0x4] sm:$0xf]
    %v240 = vld [vmem:[%s5 + $0x8] sm:$0xf]
    %v241 = vld [vmem:[%s5 + $0xc] sm:$0xf]
    %v242 = vld [vmem:[%s5 + $0x10] sm:$0xf]
    %v243 = vld [vmem:[%s5 + $0x14] sm:$0xf]
    %v244 = vld [vmem:[%s5 + $0x18] sm:$0xf]
    %v245 = vld [vmem:[%s5 + $0x1c] sm:$0xf]
    %v246 = vld [vmem:[%s5 + $0x20] sm:$0xf]
    %v247 = vld [vmem:[%s5 + $0x24] sm:$0xf]
    %v248 = vld [vmem:[%s5 + $0x28] sm:$0xf]
    %v249 = vld [vmem:[%s5 + $0x2c] sm:$0xf]
    %v250 = vld [vmem:[%s5 + $0x30] sm:$0xf]
    %v251 = vld [vmem:[%s5 + $0x34] sm:$0xf]
    %v252 = vld [vmem:[%s5 + $0x38] sm:$0xf]
    %v253 = vld [vmem:[%s5 + $0x3c] sm:$0xf]
    %v254 = vld [vmem:[%s6] sm:$0x1]
    %v256 = vlaneseq
    %v257 = vshrl.u32 %v256, 7
    %v258 = vsub.s32 0, %v257
    %v259 = vrot.slane %v254, %v258
    %v277 = vunpack.c.l.b16 %v238
    %v278 = vunpack.c.l.b16 %v239
    %v279 = vunpack.c.l.b16 %v240
    %v280 = vunpack.c.l.b16 %v241
    %v281 = vunpack.c.l.b16 %v242
    %v282 = vunpack.c.l.b16 %v243
    %v283 = vunpack.c.l.b16 %v244
    %v284 = vunpack.c.l.b16 %v245
    %v285 = vunpack.c.l.b16 %v246
    %v286 = vunpack.c.l.b16 %v247
    %v287 = vunpack.c.l.b16 %v248
    %v288 = vunpack.c.l.b16 %v249
    %v289 = vunpack.c.l.b16 %v250
    %v290 = vunpack.c.l.b16 %v251
    %v291 = vunpack.c.l.b16 %v252
    %v292 = vunpack.c.l.b16 %v253
    %v293 = vpack.c.b16 %v278, %v277
    %v294 = vpack.c.b16 %v280, %v279
    %v295 = vpack.c.b16 %v282, %v281
    %v296 = vpack.c.b16 %v284, %v283
    %v297 = vpack.c.b16 %v286, %v285
    %v298 = vpack.c.b16 %v288, %v287
    %v299 = vpack.c.b16 %v290, %v289
    %v300 = vpack.c.b16 %v292, %v291
    %309 = vmatprep.subr.bf16.mxu0 0
    %310 = vmatpush1.bf16.msra.mxu0 %v300
    %311 = vmatprep.subr.bf16.mxu0 0
    %312 = vmatpush1.bf16.msra.mxu0 %v299
    %313 = vmatprep.subr.bf16.mxu0 0
    %314 = vmatpush1.bf16.msra.mxu0 %v298
    %315 = vmatprep.subr.bf16.mxu0 0
    %316 = vmatpush1.bf16.msra.mxu0 %v297
    %317 = vmatprep.subr.bf16.mxu0 0
    %318 = vmatpush1.bf16.msra.mxu0 %v296
    %319 = vmatprep.subr.bf16.mxu0 0
    %320 = vmatpush1.bf16.msra.mxu0 %v295
    %321 = vmatprep.subr.bf16.mxu0 0
    %322 = vmatpush1.bf16.msra.mxu0 %v294
    %323 = vmatprep.subr.bf16.mxu0 0
    %324 = vmatpush1.bf16.msra.mxu0 %v293
    %325 = vmatprep.subr.bf16.mxu0 0
    %326 = vmatpush2.bf16.msra.mxu0 0
    %327 = vmatprep.subr.bf16.mxu0 0
    %328 = vmatpush2.bf16.msra.mxu0 0
    %329 = vmatprep.subr.bf16.mxu0 0
    %330 = vmatpush2.bf16.msra.mxu0 0
    %331 = vmatprep.subr.bf16.mxu0 0
    %332 = vmatpush2.bf16.msra.mxu0 0
    %333 = vmatprep.subr.bf16.mxu0 0
    %334 = vmatpush2.bf16.msra.mxu0 0
    %335 = vmatprep.subr.bf16.mxu0 0
    %336 = vmatpush2.bf16.msra.mxu0 0
    %337 = vmatprep.subr.bf16.mxu0 0
    %338 = vmatpush2.bf16.msra.mxu0 0
    %339 = vmatprep.subr.bf16.mxu0 0
    %340 = vmatpush2.bf16.msra.mxu0 0
    %341 = vmatprep.mubr.bf16.mxu0 0
    %342 = vmatmul.mubr.bf16.gmra.mxu0 %v237
    %v343 = vpop.f32.mrf.mxu0
    %v344 = vadd.f32 %v259, %v343
    %v345 = vpop.f32.mrf.mxu0
    %v346 = vpop.f32.mrf.mxu0
    %v347 = vpop.f32.mrf.mxu0
    %348 = vdwg.mxu0
    %vm349 = vcmask 64512
    %350 = vst.msk [vmem:[#allocation7] sm:$0xff] %vm349, %v344
    // Predicated region
    $region38: #{neural_net_forward.1} parent=1 // pred_check
      _
    $region39: #{neural_net_forward.1} parent=1 // pred_check_branch
      %352 = sbr.rel (0) target = $region41
    $region40: #{neural_net_forward.1} parent=1 // pred_region
      %s354 = ssub.s32 128, 128
      %355 = vsyncadd [#allocation4], %s354
      %s357 = sshll.u32 [#allocation7], 4
      %s358 = int_to_ptr.vmem [resolvable:$true] %s357
      %360 = dma.vmem_to_hbm [thread:$0]  %s358, 128, %s7, [#allocation4]
    $region41: #{neural_net_forward.1} parent=1 // pred_fallthru
      _
    // Predicated region
    $region42: #{neural_net_forward.1} parent=1 // pred_check
      _
    $region43: #{neural_net_forward.1} parent=1 // pred_check_branch
      %362 = sbr.rel (0) target = $region45
    $region44: #{neural_net_forward.1} parent=1 // pred_region
      %363 = dma.done [#allocation4], 128
    $region45: #{neural_net_forward.1} parent=1 // pred_fallthru
      _
    %364 = vsyncpa [#allocation3], 1
    %365 = vsyncpa [#allocation6], 1
    %366 = vsyncpa [#allocation4], 1

</llo_original>
